<compile_context>
chip_gen: v6e
topology: v6e:2x2x1
jax: 0.10.0
libtpu: 0.0.40
codegen_flags: <defaults>
</compile_context>

<pallas_src>
import math
import jax
import jax.numpy as jnp
from jax import lax
from jax.experimental import pallas as pl
from jax.experimental.pallas import tpu as pltpu


_INV_SQRT2 = 1.0 / math.sqrt(2.0)


def _gelu_exact(x):
    # PyTorch nn.GELU() default: exact erf-based GELU (computed in f32).
    return 0.5 * x * (1.0 + lax.erf(x * _INV_SQRT2))


def _round_up(x, m):
    return ((x + m - 1) // m) * m


def ffn_kernel(x_ref, w1_ref, b1_ref, w2_ref, b2_ref, o_ref, acc_ref):
    # Grid: (M_pad // tm, F_pad // tf); axis 1 (F) is the streamed/accumulated axis.
    #   x_ref  : (tm, Hp) bf16   token tile, resident across the F axis
    #   w1_ref : (Hp, tf) bf16   dense1 weight chunk (transposed vs torch layout)
    #   b1_ref : (1,  tf) f32
    #   w2_ref : (tf, Hp) bf16   dense2 weight chunk (transposed vs torch layout)
    #   b2_ref : (1,  Hp) f32
    #   o_ref  : (tm, Hp) f32
    #   acc_ref: (tm, Hp) f32    VMEM accumulator, persists across F steps
    f = pl.program_id(1)

    @pl.when(f == 0)
    def _():
        # Fold the dense2 bias into the accumulator init (added exactly once).
        acc_ref[...] = jnp.broadcast_to(b2_ref[...], acc_ref.shape)

    # dense1 chunk on the MXU (bf16 operands, f32 accumulation).
    h = jnp.dot(x_ref[...], w1_ref[...], preferred_element_type=jnp.float32)
    # Bias + exact GELU kept in f32 (parity with torch; f32 VPU/EUP on all chips).
    h = _gelu_exact(h + b1_ref[...])

    # dense2 partial product, accumulated in f32 VMEM.
    acc_ref[...] += jnp.dot(h.astype(jnp.bfloat16), w2_ref[...],
                            preferred_element_type=jnp.float32)

    @pl.when(f == pl.num_programs(1) - 1)
    def _():
        o_ref[...] = acc_ref[...].astype(o_ref.dtype)


def feed_forward(x, w1, b1, w2, b2, *, tm=256, tf=512,
                 vmem_limit_bytes=48 * 1024 * 1024):
    """y = dense2(GELU(dense1(x))).

    x : [B, S, H] float32
    w1: [H, F]  (torch dense1.weight.T)    b1: [F]
    w2: [F, H]  (torch dense2.weight.T)    b2: [H]
    """
    B, S, H = x.shape
    F = w1.shape[1]
    M = B * S

    # Lane-dense / MXU-aligned padded sizes (multiples of 128).
    Hp = _round_up(H, 128)
    Fp = _round_up(F, 128)
    tm = min(tm, _round_up(M, 128))
    Mp = _round_up(M, tm)
    tf = min(tf, Fp)
    Fp = _round_up(Fp, tf)

    # Pad and cast MXU operands to bf16; biases stay f32.
    x2d = jnp.pad(x.reshape(M, H).astype(jnp.bfloat16),
                  ((0, Mp - M), (0, Hp - H)))
    w1p = jnp.pad(w1.astype(jnp.bfloat16), ((0, Hp - H), (0, Fp - F)))
    w2p = jnp.pad(w2.astype(jnp.bfloat16), ((0, Fp - F), (0, Hp - H)))
    b1p = jnp.pad(b1.astype(jnp.float32), (0, Fp - F)).reshape(1, Fp)
    b2p = jnp.pad(b2.astype(jnp.float32), (0, Hp - H)).reshape(1, Hp)

    grid = (Mp // tm, Fp // tf)

    out2d = pl.pallas_call(
        ffn_kernel,
        out_shape=jax.ShapeDtypeStruct((Mp, Hp), jnp.float32),
        grid_spec=pltpu.PrefetchScalarGridSpec(
            num_scalar_prefetch=0,
            grid=grid,
            in_specs=[
                pl.BlockSpec((tm, Hp), lambda i, f: (i, 0)),   # x tile (resident over F)
                pl.BlockSpec((Hp, tf), lambda i, f: (0, f)),   # w1 chunk (streamed)
                pl.BlockSpec((1, tf), lambda i, f: (0, f)),    # b1 chunk
                pl.BlockSpec((tf, Hp), lambda i, f: (f, 0)),   # w2 chunk (streamed)
                pl.BlockSpec((1, Hp), lambda i, f: (0, 0)),    # b2
            ],
            out_specs=pl.BlockSpec((tm, Hp), lambda i, f: (i, 0)),
            scratch_shapes=[pltpu.VMEM((tm, Hp), jnp.float32)],
        ),
        compiler_params=pltpu.CompilerParams(
            dimension_semantics=("parallel", "arbitrary"),
            vmem_limit_bytes=vmem_limit_bytes,
        ),
    )(x2d, w1p, b1p, w2p, b2p)

    return out2d[:M, :H].reshape(B, S, H).astype(x.dtype)


def feed_forward_ref_f32(x, w1, b1, w2, b2):
    h = jnp.einsum("bsh,hf->bsf", x, w1) + b1
    h = _gelu_exact(h)
    return jnp.einsum("bsf,fh->bsh", h, w2) + b2


def feed_forward_ref_bf16(x, w1, b1, w2, b2):
    # Precision-matched reference: bf16 matmul operands, f32 accumulation.
    xb, w1b, w2b = (a.astype(jnp.bfloat16) for a in (x, w1, w2))
    h = jnp.einsum("bsh,hf->bsf", xb, w1b,
                   preferred_element_type=jnp.float32) + b1
    h = _gelu_exact(h)
    return jnp.einsum("bsf,fh->bsh", h.astype(jnp.bfloat16), w2b,
                      preferred_element_type=jnp.float32) + b2


if __name__ == "__main__":
    # config = {'hidden_size': 32, 'ffn_hidden_size': 128}
    B, S, H, F = 2, 8, 32, 128

    key = jax.random.PRNGKey(0)
    kx, kw1, kb1, kw2, kb2 = jax.random.split(key, 5)

    x = jax.random.normal(kx, (B, S, H), dtype=jnp.float32)

    # Deterministic parameter init (shapes match nn.Linear; stored transposed).
    bound1 = 1.0 / math.sqrt(H)
    w1 = jax.random.uniform(kw1, (H, F), minval=-bound1, maxval=bound1, dtype=jnp.float32)
    b1 = jax.random.uniform(kb1, (F,), minval=-bound1, maxval=bound1, dtype=jnp.float32)
    bound2 = 1.0 / math.sqrt(F)
    w2 = jax.random.uniform(kw2, (F, H), minval=-bound2, maxval=bound2, dtype=jnp.float32)
    b2 = jax.random.uniform(kb2, (H,), minval=-bound2, maxval=bound2, dtype=jnp.float32)

    y = feed_forward(x, w1, b1, w2, b2)
    y = jax.block_until_ready(y)
    assert y.shape == (B, S, H)

    # Tight check vs a precision-matched (bf16-operand, f32-accum) reference.
    y_bf16 = feed_forward_ref_bf16(x, w1, b1, w2, b2)
    assert jnp.allclose(y, y_bf16, atol=1e-3, rtol=1e-3), "mismatch vs bf16-matched reference"

    # Sanity check vs the full-f32 reference (loose: bf16 operand rounding).
    y_f32 = feed_forward_ref_f32(x, w1, b1, w2, b2)
    assert jnp.allclose(y, y_f32, atol=1e-1, rtol=1e-1), "mismatch vs f32 reference"

    print("KERNEL_OK")
</pallas_src>

<mosaic_0001>
module attributes {stable_mosaic.version = 11 : i64} {
  func.func @ffn_kernel(%arg0: i32, %arg1: i32, %arg2: memref<128x128xbf16, #tpu.memory_space<vmem>>, %arg3: memref<128x128xbf16, #tpu.memory_space<vmem>>, %arg4: memref<1x128xf32, #tpu.memory_space<vmem>>, %arg5: memref<128x128xbf16, #tpu.memory_space<vmem>>, %arg6: memref<1x128xf32, #tpu.memory_space<vmem>>, %arg7: memref<128x128xf32, #tpu.memory_space<vmem>>, %arg8: memref<128x128xf32, #tpu.memory_space<vmem>>) attributes {dimension_semantics = [#tpu.dimension_semantics<parallel>, #tpu.dimension_semantics<arbitrary>], iteration_bounds = array<i64: 1, 1>, scalar_prefetch = 0 : i64, scratch_operands = 1 : i64, tpu.core_type = #tpu.core_type<tc>, window_params = [{transform_indices = @transform_0, window_bounds = array<i64: 128, 128>}, {transform_indices = @transform_1, window_bounds = array<i64: 128, 128>}, {transform_indices = @transform_2, window_bounds = array<i64: 1, 128>}, {transform_indices = @transform_3, window_bounds = array<i64: 128, 128>}, {pipeline_mode = #tpu.pipeline_mode<synchronous>, transform_indices = @transform_4, window_bounds = array<i64: 1, 128>}, {transform_indices = @transform_5, window_bounds = array<i64: 128, 128>}]} {
    %c0_i32 = arith.constant 0 : i32
    %0 = arith.cmpi eq, %arg1, %c0_i32 : i32
    %1 = arith.extui %0 : i1 to i32
    %c0_i32_0 = arith.constant 0 : i32
    %2 = arith.cmpi ne, %1, %c0_i32_0 : i32
    scf.if %2 {
      %c0_18 = arith.constant 0 : index
      %c0_19 = arith.constant 0 : index
      %26 = vector.load %arg6[%c0_18, %c0_19] : memref<1x128xf32, #tpu.memory_space<vmem>>, vector<1x128xf32>
      %27 = vector.shape_cast %26 : vector<1x128xf32> to vector<1x128xf32>
      %28 = vector.broadcast %27 : vector<1x128xf32> to vector<128x128xf32>
      %c0_20 = arith.constant 0 : index
      %c0_21 = arith.constant 0 : index
      %29 = vector.load %arg8[%c0_20, %c0_21] : memref<128x128xf32, #tpu.memory_space<vmem>>, vector<128x128xf32>
      tpu.vector_store %arg8[%c0_20, %c0_21], %28 {strides = array<i32>} : memref<128x128xf32, #tpu.memory_space<vmem>>, vector<128x128xf32>,
    } else {
    }
    %c0 = arith.constant 0 : index
    %c0_1 = arith.constant 0 : index
    %3 = vector.load %arg2[%c0, %c0_1] : memref<128x128xbf16, #tpu.memory_space<vmem>>, vector<128x128xbf16>
    %c0_2 = arith.constant 0 : index
    %c0_3 = arith.constant 0 : index
    %4 = vector.load %arg3[%c0_2, %c0_3] : memref<128x128xbf16, #tpu.memory_space<vmem>>, vector<128x128xbf16>
    %cst = arith.constant dense<0.000000e+00> : vector<128x128xf32>
    %5 = tpu.matmul %3, %4, %cst {dimension_numbers = #tpu.dot_dimension_numbers<[1], [0], [0], [1], [0, 0, 1, 1], [], []>} : vector<128x128xbf16>, vector<128x128xbf16>, vector<128x128xf32> -> vector<128x128xf32>
    %c0_4 = arith.constant 0 : index
    %c0_5 = arith.constant 0 : index
    %6 = vector.load %arg4[%c0_4, %c0_5] : memref<1x128xf32, #tpu.memory_space<vmem>>, vector<1x128xf32>
    %7 = vector.broadcast %6 : vector<1x128xf32> to vector<128x128xf32>
    %8 = arith.addf %5, %7 : vector<128x128xf32>
    %cst_6 = arith.constant 5.000000e-01 : f32
    %9 = vector.broadcast %cst_6 : f32 to vector<128x128xf32>
    %10 = arith.mulf %9, %8 : vector<128x128xf32>
    %cst_7 = arith.constant 0.707106769 : f32
    %11 = vector.broadcast %cst_7 : f32 to vector<128x128xf32>
    %12 = arith.mulf %8, %11 : vector<128x128xf32>
    %13 = math.erf %12 : vector<128x128xf32>
    %cst_8 = arith.constant 1.000000e+00 : f32
    %14 = vector.broadcast %cst_8 : f32 to vector<128x128xf32>
    %15 = arith.addf %14, %13 : vector<128x128xf32>
    %16 = arith.mulf %10, %15 : vector<128x128xf32>
    %c0_9 = arith.constant 0 : index
    %c0_10 = arith.constant 0 : index
    %17 = vector.load %arg8[%c0_9, %c0_10] : memref<128x128xf32, #tpu.memory_space<vmem>>, vector<128x128xf32>
    %18 = arith.truncf %16 : vector<128x128xf32> to vector<128x128xbf16>
    %c0_11 = arith.constant 0 : index
    %c0_12 = arith.constant 0 : index
    %19 = vector.load %arg5[%c0_11, %c0_12] : memref<128x128xbf16, #tpu.memory_space<vmem>>, vector<128x128xbf16>
    %cst_13 = arith.constant dense<0.000000e+00> : vector<128x128xf32>
    %20 = tpu.matmul %18, %19, %cst_13 {dimension_numbers = #tpu.dot_dimension_numbers<[1], [0], [0], [1], [0, 0, 1, 1], [], []>} : vector<128x128xbf16>, vector<128x128xbf16>, vector<128x128xf32> -> vector<128x128xf32>
    %21 = arith.addf %17, %20 : vector<128x128xf32>
    %c0_14 = arith.constant 0 : index
    %c0_15 = arith.constant 0 : index
    %22 = vector.load %arg8[%c0_14, %c0_15] : memref<128x128xf32, #tpu.memory_space<vmem>>, vector<128x128xf32>
    tpu.vector_store %arg8[%c0_14, %c0_15], %21 {strides = array<i32>} : memref<128x128xf32, #tpu.memory_space<vmem>>, vector<128x128xf32>,
    %c0_i32_16 = arith.constant 0 : i32
    %23 = arith.cmpi eq, %arg1, %c0_i32_16 : i32
    %24 = arith.extui %23 : i1 to i32
    %c0_i32_17 = arith.constant 0 : i32
    %25 = arith.cmpi ne, %24, %c0_i32_17 : i32
    scf.if %25 {
      %c0_18 = arith.constant 0 : index
      %c0_19 = arith.constant 0 : index
      %26 = vector.load %arg8[%c0_18, %c0_19] : memref<128x128xf32, #tpu.memory_space<vmem>>, vector<128x128xf32>
      %c0_20 = arith.constant 0 : index
      %c0_21 = arith.constant 0 : index
      %27 = vector.load %arg7[%c0_20, %c0_21] : memref<128x128xf32, #tpu.memory_space<vmem>>, vector<128x128xf32>
      tpu.vector_store %arg7[%c0_20, %c0_21], %26 {strides = array<i32>} : memref<128x128xf32, #tpu.memory_space<vmem>>, vector<128x128xf32>,
    } else {
    }
    return
  }
  func.func @transform_0(%arg0: i32, %arg1: i32) -> (i32, i32) {
    %c0_i32 = arith.constant 0 : i32
    %c0_i32_0 = arith.constant 0 : i32
    return %arg0, %c0_i32 : i32, i32
  }
  func.func @transform_1(%arg0: i32, %arg1: i32) -> (i32, i32) {
    %c0_i32 = arith.constant 0 : i32
    %c0_i32_0 = arith.constant 0 : i32
    return %c0_i32, %arg1 : i32, i32
  }
  func.func @transform_2(%arg0: i32, %arg1: i32) -> (i32, i32) {
    %c0_i32 = arith.constant 0 : i32
    %c0_i32_0 = arith.constant 0 : i32
    return %c0_i32, %arg1 : i32, i32
  }
  func.func @transform_3(%arg0: i32, %arg1: i32) -> (i32, i32) {
    %c0_i32 = arith.constant 0 : i32
    %c0_i32_0 = arith.constant 0 : i32
    return %arg1, %c0_i32 : i32, i32
  }
  func.func @transform_4(%arg0: i32, %arg1: i32) -> (i32, i32) {
    %c0_i32 = arith.constant 0 : i32
    %c0_i32_0 = arith.constant 0 : i32
    %c0_i32_1 = arith.constant 0 : i32
    return %c0_i32, %c0_i32_0 : i32, i32
  }
  func.func @transform_5(%arg0: i32, %arg1: i32) -> (i32, i32) {
    %c0_i32 = arith.constant 0 : i32
    %c0_i32_0 = arith.constant 0 : i32
    return %arg0, %c0_i32 : i32, i32
  }
}

</mosaic_0001>

<llo_original>
// kernel: tpu_custom_call.1
$region0: #{tpu_custom_call.1}
  #allocation0 [shape = 'u32[]', space=smem, size = 0x4, offset = 0x4, fixed_abs, tag = 'smem constant byte address 0x4 - core index']
  #allocation1 [shape = 'u32[144,128]{1,0:T(1,128)}', space=vmem, size = 0x12000, scoped, tag = 'internal scratch']
  #allocation2 [shape = 'f32[128,128]{1,0:T(8,128)}', space=vmem, size = 0x10000, scoped, tag = 'scratch operand']
  %s0 = inlined_call_operand.hbm [shape: bf16[128,128], index: 0, kind: input, shape index: {}]
  %s1 = inlined_call_operand.hbm [shape: bf16[128,128], index: 1, kind: input, shape index: {}]
  %s2 = inlined_call_operand.vmem [shape: f32[1,128], index: 2, kind: input, shape index: {}]
  %s3 = inlined_call_operand.hbm [shape: bf16[128,128], index: 3, kind: input, shape index: {}]
  %s4 = inlined_call_operand.vmem [shape: f32[1,128], index: 4, kind: input, shape index: {}]
  %s5 = inlined_call_operand.hbm [shape: f32[128,128], index: 5, kind: output, shape index: {}]
  %s6 = sld [smem:[#allocation0]]
  $region50: #{tpu_custom_call.1} parent=0
    _
  %s8 = ssub.s32 1, %s6
  %s9 = scalar_select 0, %s8, %s6
  $region1: #{tpu_custom_call.1} parent=0
    #allocation3 [shape = 'u8[32768]{0}', space=vmem, size = 0x8000, scoped, tag = 'input window, operand 0, single buffered']
    #allocation4 [shape = 's32[1]{0}', space=sflag, size = 0x4, scoped, tag = 'scoped memory for tpu_custom_call.1']
    #allocation5 [shape = 's32[1]{0}', space=sflag, size = 0x4, scoped, tag = 'scoped memory for tpu_custom_call.1']
    #allocation6 [shape = 'u8[32768]{0}', space=vmem, size = 0x8000, scoped, tag = 'input window, operand 1, single buffered']
    #allocation7 [shape = 's32[1]{0}', space=sflag, size = 0x4, scoped, tag = 'scoped memory for tpu_custom_call.1']
    #allocation8 [shape = 'u8[32768]{0}', space=vmem, size = 0x8000, scoped, tag = 'input window, operand 3, single buffered']
    #allocation9 [shape = 'u8[65536]{0}', space=vmem, size = 0x10000, scoped, tag = 'output window, operand 0, single buffered']
    %10 = vsyncpa [#allocation4], 0
    %11 = vsyncpa [#allocation7], 0
    %12 = vsyncpa [#allocation5], 0
    // Predicated region
    $region2: #{tpu_custom_call.1} parent=1 // pred_check
      _
    $region3: #{tpu_custom_call.1} parent=1 // pred_check_branch
      %14 = sbr.rel (0) target = $region5
    $region4: #{tpu_custom_call.1} parent=1 // pred_region
      %s16 = ssub.s32 1024, 1024
      %17 = vsyncadd [#allocation4], %s16
      %s18 = sshll.u32 [#allocation3], 4
      %s19 = int_to_ptr.vmem [resolvable:$true] %s18
      %24 = dma.hbm_to_vmem [thread:$0]  %s0, 1024, %s19, [#allocation4], 64, 64, 4
    $region5: #{tpu_custom_call.1} parent=1 // pred_fallthru
      _
    // Predicated region
    $region6: #{tpu_custom_call.1} parent=1 // pred_check
      _
    $region7: #{tpu_custom_call.1} parent=1 // pred_check_branch
      %26 = sbr.rel (0) target = $region9
    $region8: #{tpu_custom_call.1} parent=1 // pred_region
      %s28 = ssub.s32 1024, 1024
      %29 = vsyncadd [#allocation7], %s28
      %s30 = sshll.u32 [#allocation6], 4
      %s31 = int_to_ptr.vmem [resolvable:$true] %s30
      %36 = dma.hbm_to_vmem [thread:$0]  %s1, 1024, %s31, [#allocation7], 64, 64, 4
    $region9: #{tpu_custom_call.1} parent=1 // pred_fallthru
      _
    // Predicated region
    $region10: #{tpu_custom_call.1} parent=1 // pred_check
      _
    $region11: #{tpu_custom_call.1} parent=1 // pred_check_branch
      %38 = sbr.rel (0) target = $region13
    $region12: #{tpu_custom_call.1} parent=1 // pred_region
      _
    $region13: #{tpu_custom_call.1} parent=1 // pred_fallthru
      _
    // Predicated region
    $region14: #{tpu_custom_call.1} parent=1 // pred_check
      _
    $region15: #{tpu_custom_call.1} parent=1 // pred_check_branch
      %40 = sbr.rel (0) target = $region17
    $region16: #{tpu_custom_call.1} parent=1 // pred_region
      %s42 = ssub.s32 1024, 1024
      %43 = vsyncadd [#allocation7], %s42
      %s44 = sshll.u32 [#allocation8], 4
      %s45 = int_to_ptr.vmem [resolvable:$true] %s44
      %50 = dma.hbm_to_vmem [thread:$0]  %s3, 1024, %s45, [#allocation7], 64, 64, 4
    $region17: #{tpu_custom_call.1} parent=1 // pred_fallthru
      _
    // Predicated region
    $region18: #{tpu_custom_call.1} parent=1 // pred_check
      _
    $region19: #{tpu_custom_call.1} parent=1 // pred_check_branch
      %52 = sbr.rel (0) target = $region21
    $region20: #{tpu_custom_call.1} parent=1 // pred_region
      _
    $region21: #{tpu_custom_call.1} parent=1 // pred_fallthru
      _
    // Predicated region
    $region22: #{tpu_custom_call.1} parent=1 // pred_check
      _
    $region23: #{tpu_custom_call.1} parent=1 // pred_check_branch
      %54 = sbr.rel (0) target = $region25
    $region24: #{tpu_custom_call.1} parent=1 // pred_region
      %55 = dma.done [#allocation4], 1024
    $region25: #{tpu_custom_call.1} parent=1 // pred_fallthru
      _
    // Predicated region
    $region26: #{tpu_custom_call.1} parent=1 // pred_check
      _
    $region27: #{tpu_custom_call.1} parent=1 // pred_check_branch
      %57 = sbr.rel (0) target = $region29
    $region28: #{tpu_custom_call.1} parent=1 // pred_region
      %58 = dma.done [#allocation7], 1024
    $region29: #{tpu_custom_call.1} parent=1 // pred_fallthru
      _
    // Predicated region
    $region30: #{tpu_custom_call.1} parent=1 // pred_check
      _
    $region31: #{tpu_custom_call.1} parent=1 // pred_check_branch
      %60 = sbr.rel (0) target = $region33
    $region32: #{tpu_custom_call.1} parent=1 // pred_region
      %61 = dma.done [#allocation7], 1024
    $region33: #{tpu_custom_call.1} parent=1 // pred_fallthru
      _
    %p63 = scmp.eq.s32.totalorder 0, 0
    // Predicated region
    $region34: #{tpu_custom_call.1} parent=1 // pred_check
      %p64 = pneg %p63
    $region35: #{tpu_custom_call.1} parent=1 // pred_check_branch
      %66 = sbr.rel (%p64) target = $region37
    $region36: #{tpu_custom_call.1} parent=1 // pred_region
      %v67 = vld [vmem:[%s4] sm:$0x1]
      %v69 = vlaneseq
      %v70 = vshrl.u32 %v69, 7
      %v71 = vsub.s32 0, %v70
      %v72 = vrot.slane %v67, %v71
      %74 = vst [vmem:[#allocation2] sm:$0xff] %v72
      %75 = vst [vmem:[#allocation2 + $0x8] sm:$0xff] %v72
      %76 = vst [vmem:[#allocation2 + $0x10] sm:$0xff] %v72
      %77 = vst [vmem:[#allocation2 + $0x18] sm:$0xff] %v72
      %78 = vst [vmem:[#allocation2 + $0x20] sm:$0xff] %v72
      %79 = vst [vmem:[#allocation2 + $0x28] sm:$0xff] %v72
      %80 = vst [vmem:[#allocation2 + $0x30] sm:$0xff] %v72
      %81 = vst [vmem:[#allocation2 + $0x38] sm:$0xff] %v72
      %82 = vst [vmem:[#allocation2 + $0x40] sm:$0xff] %v72
      %83 = vst [vmem:[#allocation2 + $0x48] sm:$0xff] %v72
      %84 = vst [vmem:[#allocation2 + $0x50] sm:$0xff] %v72
      %85 = vst [vmem:[#allocation2 + $0x58] sm:$0xff] %v72
      %86 = vst [vmem:[#allocation2 + $0x60] sm:$0xff] %v72
      %87 = vst [vmem:[#allocation2 + $0x68] sm:$0xff] %v72
      %88 = vst [vmem:[#allocation2 + $0x70] sm:$0xff] %v72
      %89 = vst [vmem:[#allocation2 + $0x78] sm:$0xff] %v72
    $region37: #{tpu_custom_call.1} parent=1 // pred_fallthru
      _
    %v90 = vld [vmem:[#allocation3] sm:$0xf]
    %v91 = vld [vmem:[#allocation3 + $0x4] sm:$0xf]
    %v92 = vld [vmem:[#allocation3 + $0x8] sm:$0xf]
    %v93 = vld [vmem:[#allocation3 + $0xc] sm:$0xf]
    %v94 = vld [vmem:[#allocation3 + $0x10] sm:$0xf]
    %v95 = vld [vmem:[#allocation3 + $0x14] sm:$0xf]
    %v96 = vld [vmem:[#allocation3 + $0x18] sm:$0xf]
    %v97 = vld [vmem:[#allocation3 + $0x1c] sm:$0xf]
    %v98 = vld [vmem:[#allocation3 + $0x20] sm:$0xf]
    %v99 = vld [vmem:[#allocation3 + $0x24] sm:$0xf]
    %v100 = vld [vmem:[#allocation3 + $0x28] sm:$0xf]
    %v101 = vld [vmem:[#allocation3 + $0x2c] sm:$0xf]
    %v102 = vld [vmem:[#allocation3 + $0x30] sm:$0xf]
    %v103 = vld [vmem:[#allocation3 + $0x34] sm:$0xf]
    %v104 = vld [vmem:[#allocation3 + $0x38] sm:$0xf]
    %v105 = vld [vmem:[#allocation3 + $0x3c] sm:$0xf]
    %v106 = vld [vmem:[#allocation6] sm:$0xf]
    %v107 = vld [vmem:[#allocation6 + $0x4] sm:$0xf]
    %v108 = vld [vmem:[#allocation6 + $0x8] sm:$0xf]
    %v109 = vld [vmem:[#allocation6 + $0xc] sm:$0xf]
    %v110 = vld [vmem:[#allocation6 + $0x10] sm:$0xf]
    %v111 = vld [vmem:[#allocation6 + $0x14] sm:$0xf]
    %v112 = vld [vmem:[#allocation6 + $0x18] sm:$0xf]
    %v113 = vld [vmem:[#allocation6 + $0x1c] sm:$0xf]
    %v114 = vld [vmem:[#allocation6 + $0x20] sm:$0xf]
    %v115 = vld [vmem:[#allocation6 + $0x24] sm:$0xf]
    %v116 = vld [vmem:[#allocation6 + $0x28] sm:$0xf]
    %v117 = vld [vmem:[#allocation6 + $0x2c] sm:$0xf]
    %v118 = vld [vmem:[#allocation6 + $0x30] sm:$0xf]
    %v119 = vld [vmem:[#allocation6 + $0x34] sm:$0xf]
    %v120 = vld [vmem:[#allocation6 + $0x38] sm:$0xf]
    %v121 = vld [vmem:[#allocation6 + $0x3c] sm:$0xf]
    %v122 = vld [vmem:[%s2] sm:$0x1]
    %v124 = vlaneseq
    %v125 = vshrl.u32 %v124, 7
    %v126 = vsub.s32 0, %v125
    %v127 = vrot.slane %v122, %v126
    %v145 = vunpack.c.l.b16 %v90
    %v146 = vunpack.c.l.b16 %v91
    %v147 = vunpack.c.l.b16 %v92
    %v148 = vunpack.c.l.b16 %v93
    %v149 = vunpack.c.l.b16 %v94
    %v150 = vunpack.c.l.b16 %v95
    %v151 = vunpack.c.l.b16 %v96
    %v152 = vunpack.c.l.b16 %v97
    %v153 = vunpack.c.l.b16 %v98
    %v154 = vunpack.c.l.b16 %v99
    %v155 = vunpack.c.l.b16 %v100
    %v156 = vunpack.c.l.b16 %v101
    %v157 = vunpack.c.l.b16 %v102
    %v158 = vunpack.c.l.b16 %v103
    %v159 = vunpack.c.l.b16 %v104
    %v160 = vunpack.c.l.b16 %v105
    %v161 = vpack.c.b16 %v146, %v145
    %v162 = vpack.c.b16 %v148, %v147
    %v163 = vpack.c.b16 %v150, %v149
    %v164 = vpack.c.b16 %v152, %v151
    %v165 = vpack.c.b16 %v154, %v153
    %v166 = vpack.c.b16 %v156, %v155
    %v167 = vpack.c.b16 %v158, %v157
    %v168 = vpack.c.b16 %v160, %v159
    %v193 = vunpack.c.l.b16 %v106
    %v194 = vunpack.c.l.b16 %v107
    %v195 = vunpack.c.l.b16 %v108
    %v196 = vunpack.c.l.b16 %v109
    %v197 = vunpack.c.l.b16 %v110
    %v198 = vunpack.c.l.b16 %v111
    %v199 = vunpack.c.l.b16 %v112
    %v200 = vunpack.c.l.b16 %v113
    %v201 = vunpack.c.l.b16 %v114
    %v202 = vunpack.c.l.b16 %v115
    %v203 = vunpack.c.l.b16 %v116
    %v204 = vunpack.c.l.b16 %v117
    %v205 = vunpack.c.l.b16 %v118
    %v206 = vunpack.c.l.b16 %v119
    %v207 = vunpack.c.l.b16 %v120
    %v208 = vunpack.c.l.b16 %v121
    %v209 = vpack.c.b16 %v194, %v193
    %v210 = vpack.c.b16 %v196, %v195
    %v211 = vpack.c.b16 %v198, %v197
    %v212 = vpack.c.b16 %v200, %v199
    %v213 = vpack.c.b16 %v202, %v201
    %v214 = vpack.c.b16 %v204, %v203
    %v215 = vpack.c.b16 %v206, %v205
    %v216 = vpack.c.b16 %v208, %v207
    %225 = vmatprep.subr.bf16.mxu0 0
    %226 = vmatpush1.bf16.msra.mxu0 %v216
    %227 = vmatprep.subr.bf16.mxu0 0
    %228 = vmatpush1.bf16.msra.mxu0 %v215
    %229 = vmatprep.subr.bf16.mxu0 0
    %230 = vmatpush1.bf16.msra.mxu0 %v214
    %231 = vmatprep.subr.bf16.mxu0 0
    %232 = vmatpush1.bf16.msra.mxu0 %v213
    %233 = vmatprep.subr.bf16.mxu0 0
    %234 = vmatpush1.bf16.msra.mxu0 %v212
    %235 = vmatprep.subr.bf16.mxu0 0
    %236 = vmatpush1.bf16.msra.mxu0 %v211
    %237 = vmatprep.subr.bf16.mxu0 0
    %238 = vmatpush1.bf16.msra.mxu0 %v210
    %239 = vmatprep.subr.bf16.mxu0 0
    %240 = vmatpush1.bf16.msra.mxu0 %v209
    %241 = vmatprep.subr.bf16.mxu0 0
    %242 = vmatpush2.bf16.msra.mxu0 0
    %243 = vmatprep.subr.bf16.mxu0 0
    %244 = vmatpush2.bf16.msra.mxu0 0
    %245 = vmatprep.subr.bf16.mxu0 0
    %246 = vmatpush2.bf16.msra.mxu0 0
    %247 = vmatprep.subr.bf16.mxu0 0
    %248 = vmatpush2.bf16.msra.mxu0 0
    %249 = vmatprep.subr.bf16.mxu0 0
    %250 = vmatpush2.bf16.msra.mxu0 0
    %251 = vmatprep.subr.bf16.mxu0 0
    %252 = vmatpush2.bf16.msra.mxu0 0
    %253 = vmatprep.subr.bf16.mxu0 0
    %254 = vmatpush2.bf16.msra.mxu0 0
    %255 = vmatprep.subr.bf16.mxu0 0
    %256 = vmatpush2.bf16.msra.mxu0 0
    %257 = vmatprep.mubr.bf16.mxu0 0
    %258 = vmatmul.mubr.bf16.gmra.mxu0 %v161
    %v259 = vpop.f32.mrf.mxu0
    %v260 = vadd.f32 %v127, %v259
    %v261 = vpop.f32.mrf.mxu0
    %v262 = vpop.f32.mrf.mxu0
    %v263 = vadd.f32 %v127, %v262
    %v264 = vpop.f32.mrf.mxu0
    %265 = vmatprep.mubr.bf16.mxu0 0
    %266 = vmatmul.mubr.bf16.gmra.mxu0 %v162
    %v267 = vpop.f32.mrf.mxu0
    %v268 = vadd.f32 %v127, %v267
    %v269 = vpop.f32.mrf.mxu0
    %v270 = vpop.f32.mrf.mxu0
    %v271 = vadd.f32 %v127, %v270
    %v272 = vpop.f32.mrf.mxu0
    %273 = vmatprep.mubr.bf16.mxu0 0
    %274 = vmatmul.mubr.bf16.gmra.mxu0 %v163
    %v275 = vpop.f32.mrf.mxu0
    %v276 = vadd.f32 %v127, %v275
    %v277 = vpop.f32.mrf.mxu0
    %v278 = vpop.f32.mrf.mxu0
    %v279 = vadd.f32 %v127, %v278
    %v280 = vpop.f32.mrf.mxu0
    %281 = vmatprep.mubr.bf16.mxu0 0
    %282 = vmatmul.mubr.bf16.gmra.mxu0 %v164
    %v283 = vpop.f32.mrf.mxu0
    %v284 = vadd.f32 %v127, %v283
    %v285 = vpop.f32.mrf.mxu0
    %v286 = vpop.f32.mrf.mxu0
    %v287 = vadd.f32 %v127, %v286
    %v288 = vpop.f32.mrf.mxu0
    %289 = vmatprep.mubr.bf16.mxu0 0
    %290 = vmatmul.mubr.bf16.gmra.mxu0 %v165
    %v291 = vpop.f32.mrf.mxu0
    %v292 = vadd.f32 %v127, %v291
    %v293 = vpop.f32.mrf.mxu0
    %v294 = vpop.f32.mrf.mxu0
    %v295 = vadd.f32 %v127, %v294
    %v296 = vpop.f32.mrf.mxu0
    %297 = vmatprep.mubr.bf16.mxu0 0
    %298 = vmatmul.mubr.bf16.gmra.mxu0 %v166
    %v299 = vpop.f32.mrf.mxu0
    %v300 = vadd.f32 %v127, %v299
    %v301 = vpop.f32.mrf.mxu0
    %v302 = vpop.f32.mrf.mxu0
    %v303 = vadd.f32 %v127, %v302
    %v304 = vpop.f32.mrf.mxu0
    %305 = vmatprep.mubr.bf16.mxu0 0
    %306 = vmatmul.mubr.bf16.gmra.mxu0 %v167
    %v307 = vpop.f32.mrf.mxu0
    %v308 = vadd.f32 %v127, %v307
    %v309 = vpop.f32.mrf.mxu0
    %v310 = vpop.f32.mrf.mxu0
    %v311 = vadd.f32 %v127, %v310
    %v312 = vpop.f32.mrf.mxu0
    %313 = vmatprep.mubr.bf16.mxu0 0
    %314 = vmatmul.mubr.bf16.gmra.mxu0 %v168
    %v315 = vpop.f32.mrf.mxu0
    %v316 = vadd.f32 %v127, %v315
    %v317 = vpop.f32.mrf.mxu0
    %v318 = vpop.f32.mrf.mxu0
    %v319 = vadd.f32 %v127, %v318
    %v320 = vpop.f32.mrf.mxu0
    %321 = vdwg.mxu0
    %v322 = vmul.f32 %v260, 0.5
    %v323 = vmul.f32 %v263, 0.5
    %v324 = vmul.f32 %v268, 0.5
    %v325 = vmul.f32 %v271, 0.5
    %v326 = vmul.f32 %v276, 0.5
    %v327 = vmul.f32 %v279, 0.5
    %v328 = vmul.f32 %v284, 0.5
    %v329 = vmul.f32 %v287, 0.5
    %v330 = vmul.f32 %v292, 0.5
    %v331 = vmul.f32 %v295, 0.5
    %v332 = vmul.f32 %v300, 0.5
    %v333 = vmul.f32 %v303, 0.5
    %v334 = vmul.f32 %v308, 0.5
    %v335 = vmul.f32 %v311, 0.5
    %v336 = vmul.f32 %v316, 0.5
    %v337 = vmul.f32 %v319, 0.5
    %v338 = vmul.f32 %v260, 0.70710677
    %v339 = vmul.f32 %v263, 0.70710677
    %v340 = vmul.f32 %v268, 0.70710677
    %v341 = vmul.f32 %v271, 0.70710677
    %v342 = vmul.f32 %v276, 0.70710677
    %v343 = vmul.f32 %v279, 0.70710677
    %v344 = vmul.f32 %v284, 0.70710677
    %v345 = vmul.f32 %v287, 0.70710677
    %v346 = vmul.f32 %v292, 0.70710677
    %v347 = vmul.f32 %v295, 0.70710677
    %v348 = vmul.f32 %v300, 0.70710677
    %v349 = vmul.f32 %v303, 0.70710677
    %v350 = vmul.f32 %v308, 0.70710677
    %v351 = vmul.f32 %v311, 0.70710677
    %v352 = vmul.f32 %v316, 0.70710677
    %v353 = vmul.f32 %v319, 0.70710677
    %v354 = verf.f32.pop %v338
    %v355 = verf.f32.pop %v339
    %v356 = verf.f32.pop %v340
    %v357 = verf.f32.pop %v341
    %v358 = verf.f32.pop %v342
    %v359 = verf.f32.pop %v343
    %v360 = verf.f32.pop %v344
    %v361 = verf.f32.pop %v345
    %v362 = verf.f32.pop %v346
    %v363 = verf.f32.pop %v347
    %v364 = verf.f32.pop %v348
    %v365 = verf.f32.pop %v349
    %v366 = verf.f32.pop %v350
    %v367 = verf.f32.pop %v351
    %v368 = verf.f32.pop %v352
    %v369 = verf.f32.pop %v353
    %v370 = vadd.f32 %v354, 1.0
    %v371 = vadd.f32 %v355, 1.0
    %v372 = vadd.f32 %v356, 1.0
    %v373 = vadd.f32 %v357, 1.0
    %v374 = vadd.f32 %v358, 1.0
    %v375 = vadd.f32 %v359, 1.0
    %v376 = vadd.f32 %v360, 1.0
    %v377 = vadd.f32 %v361, 1.0
    %v378 = vadd.f32 %v362, 1.0
    %v379 = vadd.f32 %v363, 1.0
    %v380 = vadd.f32 %v364, 1.0
    %v381 = vadd.f32 %v365, 1.0
    %v382 = vadd.f32 %v366, 1.0
    %v383 = vadd.f32 %v367, 1.0
    %v384 = vadd.f32 %v368, 1.0
    %v385 = vadd.f32 %v369, 1.0
    %v386 = vmul.f32 %v322, %v370
    %v387 = vmul.f32 %v323, %v371
    %v388 = vmul.f32 %v324, %v372
    %v389 = vmul.f32 %v325, %v373
    %v390 = vmul.f32 %v326, %v374
    %v391 = vmul.f32 %v327, %v375
    %v392 = vmul.f32 %v328, %v376
    %v393 = vmul.f32 %v329, %v377
    %v394 = vmul.f32 %v330, %v378
    %v395 = vmul.f32 %v331, %v379
    %v396 = vmul.f32 %v332, %v380
    %v397 = vmul.f32 %v333, %v381
    %v398 = vmul.f32 %v334, %v382
    %v399 = vmul.f32 %v335, %v383
    %v400 = vmul.f32 %v336, %v384
    %v401 = vmul.f32 %v337, %v385
    %v402 = vld [vmem:[#allocation2] sm:$0xff]
    %v403 = vld [vmem:[#allocation2 + $0x8] sm:$0xff]
    %v404 = vld [vmem:[#allocation2 + $0x10] sm:$0xff]
    %v405 = vld [vmem:[#allocation2 + $0x18] sm:$0xff]
    %v406 = vld [vmem:[#allocation2 + $0x20] sm:$0xff]
    %v407 = vld [vmem:[#allocation2 + $0x28] sm:$0xff]
    %v408 = vld [vmem:[#allocation2 + $0x30] sm:$0xff]
    %v409 = vld [vmem:[#allocation2 + $0x38] sm:$0xff]
    %v410 = vld [vmem:[#allocation2 + $0x40] sm:$0xff]
    %v411 = vld [vmem:[#allocation2 + $0x48] sm:$0xff]
    %v412 = vld [vmem:[#allocation2 + $0x50] sm:$0xff]
    %v413 = vld [vmem:[#allocation2 + $0x58] sm:$0xff]
    %v414 = vld [vmem:[#allocation2 + $0x60] sm:$0xff]
    %v415 = vld [vmem:[#allocation2 + $0x68] sm:$0xff]
    %v416 = vld [vmem:[#allocation2 + $0x70] sm:$0xff]
    %v417 = vld [vmem:[#allocation2 + $0x78] sm:$0xff]
    %v418 = vpack.c.bf16 %v387, %v386
    %v419 = vpack.c.bf16 %v389, %v388
    %v420 = vpack.c.bf16 %v391, %v390
    %v421 = vpack.c.bf16 %v393, %v392
    %v422 = vpack.c.bf16 %v395, %v394
    %v423 = vpack.c.bf16 %v397, %v396
    %v424 = vpack.c.bf16 %v399, %v398
    %v425 = vpack.c.bf16 %v401, %v400
    %v426 = vld [vmem:[#allocation8] sm:$0xf]
    %v427 = vld [vmem:[#allocation8 + $0x4] sm:$0xf]
    %v428 = vld [vmem:[#allocation8 + $0x8] sm:$0xf]
    %v429 = vld [vmem:[#allocation8 + $0xc] sm:$0xf]
    %v430 = vld [vmem:[#allocation8 + $0x10] sm:$0xf]
    %v431 = vld [vmem:[#allocation8 + $0x14] sm:$0xf]
    %v432 = vld [vmem:[#allocation8 + $0x18] sm:$0xf]
    %v433 = vld [vmem:[#allocation8 + $0x1c] sm:$0xf]
    %v434 = vld [vmem:[#allocation8 + $0x20] sm:$0xf]
    %v435 = vld [vmem:[#allocation8 + $0x24] sm:$0xf]
    %v436 = vld [vmem:[#allocation8 + $0x28] sm:$0xf]
    %v437 = vld [vmem:[#allocation8 + $0x2c] sm:$0xf]
    %v438 = vld [vmem:[#allocation8 + $0x30] sm:$0xf]
    %v439 = vld [vmem:[#allocation8 + $0x34] sm:$0xf]
    %v440 = vld [vmem:[#allocation8 + $0x38] sm:$0xf]
    %v441 = vld [vmem:[#allocation8 + $0x3c] sm:$0xf]
    %v458 = vunpack.c.l.b16 %v426
    %v459 = vunpack.c.l.b16 %v427
    %v460 = vunpack.c.l.b16 %v428
    %v461 = vunpack.c.l.b16 %v429
    %v462 = vunpack.c.l.b16 %v430
    %v463 = vunpack.c.l.b16 %v431
    %v464 = vunpack.c.l.b16 %v432
    %v465 = vunpack.c.l.b16 %v433
    %v466 = vunpack.c.l.b16 %v434
    %v467 = vunpack.c.l.b16 %v435
    %v468 = vunpack.c.l.b16 %v436
    %v469 = vunpack.c.l.b16 %v437
    %v470 = vunpack.c.l.b16 %v438
    %v471 = vunpack.c.l.b16 %v439
    %v472 = vunpack.c.l.b16 %v440
    %v473 = vunpack.c.l.b16 %v441
    %v474 = vpack.c.b16 %v459, %v458
    %v475 = vpack.c.b16 %v461, %v460
    %v476 = vpack.c.b16 %v463, %v462
    %v477 = vpack.c.b16 %v465, %v464
    %v478 = vpack.c.b16 %v467, %v466
    %v479 = vpack.c.b16 %v469, %v468
    %v480 = vpack.c.b16 %v471, %v470
    %v481 = vpack.c.b16 %v473, %v472
    %490 = vmatprep.subr.bf16.mxu0 0
    %491 = vmatpush1.bf16.msra.mxu0 %v481
    %492 = vmatprep.subr.bf16.mxu0 0
    %493 = vmatpush1.bf16.msra.mxu0 %v480
    %494 = vmatprep.subr.bf16.mxu0 0
    %495 = vmatpush1.bf16.msra.mxu0 %v479
    %496 = vmatprep.subr.bf16.mxu0 0
    %497 = vmatpush1.bf16.msra.mxu0 %v478
    %498 = vmatprep.subr.bf16.mxu0 0
    %499 = vmatpush1.bf16.msra.mxu0 %v477
    %500 = vmatprep.subr.bf16.mxu0 0
    %501 = vmatpush1.bf16.msra.mxu0 %v476
    %502 = vmatprep.subr.bf16.mxu0 0
    %503 = vmatpush1.bf16.msra.mxu0 %v475
    %504 = vmatprep.subr.bf16.mxu0 0
    %505 = vmatpush1.bf16.msra.mxu0 %v474
    %506 = vmatprep.subr.bf16.mxu0 0
    %507 = vmatpush2.bf16.msra.mxu0 0
    %508 = vmatprep.subr.bf16.mxu0 0
    %509 = vmatpush2.bf16.msra.mxu0 0
    %510 = vmatprep.subr.bf16.mxu0 0
    %511 = vmatpush2.bf16.msra.mxu0 0
    %512 = vmatprep.subr.bf16.mxu0 0
    %513 = vmatpush2.bf16.msra.mxu0 0
    %514 = vmatprep.subr.bf16.mxu0 0
    %515 = vmatpush2.bf16.msra.mxu0 0
    %516 = vmatprep.subr.bf16.mxu0 0
    %517 = vmatpush2.bf16.msra.mxu0 0
    %518 = vmatprep.subr.bf16.mxu0 0
    %519 = vmatpush2.bf16.msra.mxu0 0
    %520 = vmatprep.subr.bf16.mxu0 0
    %521 = vmatpush2.bf16.msra.mxu0 0
    %522 = vmatprep.mubr.bf16.mxu0 0
    %523 = vmatmul.mubr.bf16.gmra.mxu0 %v418
    %v524 = vpop.f32.mrf.mxu0
    %v525 = vadd.f32 0.0, %v524
    %v526 = vpop.f32.mrf.mxu0
    %v527 = vpop.f32.mrf.mxu0
    %v528 = vadd.f32 0.0, %v527
    %v529 = vpop.f32.mrf.mxu0
    %530 = vmatprep.mubr.bf16.mxu0 0
    %531 = vmatmul.mubr.bf16.gmra.mxu0 %v419
    %v532 = vpop.f32.mrf.mxu0
    %v533 = vadd.f32 0.0, %v532
    %v534 = vpop.f32.mrf.mxu0
    %v535 = vpop.f32.mrf.mxu0
    %v536 = vadd.f32 0.0, %v535
    %v537 = vpop.f32.mrf.mxu0
    %538 = vmatprep.mubr.bf16.mxu0 0
    %539 = vmatmul.mubr.bf16.gmra.mxu0 %v420
    %v540 = vpop.f32.mrf.mxu0
    %v541 = vadd.f32 0.0, %v540
    %v542 = vpop.f32.mrf.mxu0
    %v543 = vpop.f32.mrf.mxu0
    %v544 = vadd.f32 0.0, %v543
    %v545 = vpop.f32.mrf.mxu0
    %546 = vmatprep.mubr.bf16.mxu0 0
    %547 = vmatmul.mubr.bf16.gmra.mxu0 %v421
    %v548 = vpop.f32.mrf.mxu0
    %v549 = vadd.f32 0.0, %v548
    %v550 = vpop.f32.mrf.mxu0
    %v551 = vpop.f32.mrf.mxu0
    %v552 = vadd.f32 0.0, %v551
    %v553 = vpop.f32.mrf.mxu0
    %554 = vmatprep.mubr.bf16.mxu0 0
    %555 = vmatmul.mubr.bf16.gmra.mxu0 %v422
    %v556 = vpop.f32.mrf.mxu0
    %v557 = vadd.f32 0.0, %v556
    %v558 = vpop.f32.mrf.mxu0
    %v559 = vpop.f32.mrf.mxu0
    %v560 = vadd.f32 0.0, %v559
    %v561 = vpop.f32.mrf.mxu0
    %562 = vmatprep.mubr.bf16.mxu0 0
    %563 = vmatmul.mubr.bf16.gmra.mxu0 %v423
    %v564 = vpop.f32.mrf.mxu0
    %v565 = vadd.f32 0.0, %v564
    %v566 = vpop.f32.mrf.mxu0
    %v567 = vpop.f32.mrf.mxu0
    %v568 = vadd.f32 0.0, %v567
    %v569 = vpop.f32.mrf.mxu0
    %570 = vmatprep.mubr.bf16.mxu0 0
    %571 = vmatmul.mubr.bf16.gmra.mxu0 %v424
    %v572 = vpop.f32.mrf.mxu0
    %v573 = vadd.f32 0.0, %v572
    %v574 = vpop.f32.mrf.mxu0
    %v575 = vpop.f32.mrf.mxu0
    %v576 = vadd.f32 0.0, %v575
    %v577 = vpop.f32.mrf.mxu0
    %578 = vmatprep.mubr.bf16.mxu0 0
    %579 = vmatmul.mubr.bf16.gmra.mxu0 %v425
    %v580 = vpop.f32.mrf.mxu0
    %v581 = vadd.f32 0.0, %v580
    %v582 = vpop.f32.mrf.mxu0
    %v583 = vpop.f32.mrf.mxu0
    %v584 = vadd.f32 0.0, %v583
    %v585 = vpop.f32.mrf.mxu0
    %586 = vdwg.mxu0
    %v587 = vadd.f32 %v402, %v525
    %v588 = vadd.f32 %v403, %v528
    %v589 = vadd.f32 %v404, %v533
    %v590 = vadd.f32 %v405, %v536
    %v591 = vadd.f32 %v406, %v541
    %v592 = vadd.f32 %v407, %v544
    %v593 = vadd.f32 %v408, %v549
    %v594 = vadd.f32 %v409, %v552
    %v595 = vadd.f32 %v410, %v557
    %v596 = vadd.f32 %v411, %v560
    %v597 = vadd.f32 %v412, %v565
    %v598 = vadd.f32 %v413, %v568
    %v599 = vadd.f32 %v414, %v573
    %v600 = vadd.f32 %v415, %v576
    %v601 = vadd.f32 %v416, %v581
    %v602 = vadd.f32 %v417, %v584
    %603 = vst [vmem:[#allocation2] sm:$0xff] %v587
    %604 = vst [vmem:[#allocation2 + $0x8] sm:$0xff] %v588
    %605 = vst [vmem:[#allocation2 + $0x10] sm:$0xff] %v589
    %606 = vst [vmem:[#allocation2 + $0x18] sm:$0xff] %v590
    %607 = vst [vmem:[#allocation2 + $0x20] sm:$0xff] %v591
    %608 = vst [vmem:[#allocation2 + $0x28] sm:$0xff] %v592
    %609 = vst [vmem:[#allocation2 + $0x30] sm:$0xff] %v593
    %610 = vst [vmem:[#allocation2 + $0x38] sm:$0xff] %v594
    %611 = vst [vmem:[#allocation2 + $0x40] sm:$0xff] %v595
    %612 = vst [vmem:[#allocation2 + $0x48] sm:$0xff] %v596
    %613 = vst [vmem:[#allocation2 + $0x50] sm:$0xff] %v597
    %614 = vst [vmem:[#allocation2 + $0x58] sm:$0xff] %v598
    %615 = vst [vmem:[#allocation2 + $0x60] sm:$0xff] %v599
    %616 = vst [vmem:[#allocation2 + $0x68] sm:$0xff] %v600
    %617 = vst [vmem:[#allocation2 + $0x70] sm:$0xff] %v601
    %618 = vst [vmem:[#allocation2 + $0x78] sm:$0xff] %v602
    // Predicated region
    $region38: #{tpu_custom_call.1} parent=1 // pred_check
      %p619 = pneg %p63
    $region39: #{tpu_custom_call.1} parent=1 // pred_check_branch
      %621 = sbr.rel (%p619) target = $region41
    $region40: #{tpu_custom_call.1} parent=1 // pred_region
      %v622 = vld [vmem:[#allocation2] sm:$0xff]
      %v623 = vld [vmem:[#allocation2 + $0x8] sm:$0xff]
      %v624 = vld [vmem:[#allocation2 + $0x10] sm:$0xff]
      %v625 = vld [vmem:[#allocation2 + $0x18] sm:$0xff]
      %v626 = vld [vmem:[#allocation2 + $0x20] sm:$0xff]
      %v627 = vld [vmem:[#allocation2 + $0x28] sm:$0xff]
      %v628 = vld [vmem:[#allocation2 + $0x30] sm:$0xff]
      %v629 = vld [vmem:[#allocation2 + $0x38] sm:$0xff]
      %v630 = vld [vmem:[#allocation2 + $0x40] sm:$0xff]
      %v631 = vld [vmem:[#allocation2 + $0x48] sm:$0xff]
      %v632 = vld [vmem:[#allocation2 + $0x50] sm:$0xff]
      %v633 = vld [vmem:[#allocation2 + $0x58] sm:$0xff]
      %v634 = vld [vmem:[#allocation2 + $0x60] sm:$0xff]
      %v635 = vld [vmem:[#allocation2 + $0x68] sm:$0xff]
      %v636 = vld [vmem:[#allocation2 + $0x70] sm:$0xff]
      %v637 = vld [vmem:[#allocation2 + $0x78] sm:$0xff]
      %638 = vst [vmem:[#allocation9] sm:$0xff] %v622
      %639 = vst [vmem:[#allocation9 + $0x8] sm:$0xff] %v623
      %640 = vst [vmem:[#allocation9 + $0x10] sm:$0xff] %v624
      %641 = vst [vmem:[#allocation9 + $0x18] sm:$0xff] %v625
      %642 = vst [vmem:[#allocation9 + $0x20] sm:$0xff] %v626
      %643 = vst [vmem:[#allocation9 + $0x28] sm:$0xff] %v627
      %644 = vst [vmem:[#allocation9 + $0x30] sm:$0xff] %v628
      %645 = vst [vmem:[#allocation9 + $0x38] sm:$0xff] %v629
      %646 = vst [vmem:[#allocation9 + $0x40] sm:$0xff] %v630
      %647 = vst [vmem:[#allocation9 + $0x48] sm:$0xff] %v631
      %648 = vst [vmem:[#allocation9 + $0x50] sm:$0xff] %v632
      %649 = vst [vmem:[#allocation9 + $0x58] sm:$0xff] %v633
      %650 = vst [vmem:[#allocation9 + $0x60] sm:$0xff] %v634
      %651 = vst [vmem:[#allocation9 + $0x68] sm:$0xff] %v635
      %652 = vst [vmem:[#allocation9 + $0x70] sm:$0xff] %v636
      %653 = vst [vmem:[#allocation9 + $0x78] sm:$0xff] %v637
    $region41: #{tpu_custom_call.1} parent=1 // pred_fallthru
      _
    // Predicated region
    $region42: #{tpu_custom_call.1} parent=1 // pred_check
      _
    $region43: #{tpu_custom_call.1} parent=1 // pred_check_branch
      %655 = sbr.rel (0) target = $region45
    $region44: #{tpu_custom_call.1} parent=1 // pred_region
      %s657 = ssub.s32 2048, 2048
      %658 = vsyncadd [#allocation5], %s657
      %s659 = sshll.u32 [#allocation9], 4
      %s660 = int_to_ptr.vmem [resolvable:$true] %s659
      %665 = dma.vmem_to_hbm [thread:$0]  %s660, 2048, %s5, [#allocation5], 128, 128, 8
    $region45: #{tpu_custom_call.1} parent=1 // pred_fallthru
      _
    // Predicated region
    $region46: #{tpu_custom_call.1} parent=1 // pred_check
      _
    $region47: #{tpu_custom_call.1} parent=1 // pred_check_branch
      %667 = sbr.rel (0) target = $region49
    $region48: #{tpu_custom_call.1} parent=1 // pred_region
      %668 = dma.done [#allocation5], 2048
    $region49: #{tpu_custom_call.1} parent=1 // pred_fallthru
      _
    %669 = vsyncpa [#allocation4], 1
    %670 = vsyncpa [#allocation7], 1
    %671 = vsyncpa [#allocation5], 1

</llo_original>
